<compile_context>
chip_gen: v7x
topology: tpu7x:2x2x1
jax: 0.10.0
libtpu: 0.0.40
codegen_flags: <defaults>
</compile_context>

<pallas_src>
import functools

import jax
import jax.numpy as jnp
from jax import lax
from jax.experimental import pallas as pl
from jax.experimental.pallas import tpu as pltpu

LANES = 128
SUBLANES = 8
MAX_ROW_BLOCK = 2048  # (2048, 128) f32 block = 1 MiB per input (fits all gens)


def _focal_loss_kernel(x_ref, t_ref, out_ref, *,
                       alpha, gamma, n, row_block, needs_mask):
    x = x_ref[...].astype(jnp.float32)
    t = t_ref[...].astype(jnp.float32)

    # Numerically stable BCE-with-logits (reduction='none'):
    #   bce = max(x, 0) - x*t + log(1 + exp(-|x|))
    bce = jnp.maximum(x, 0.0) - x * t + jnp.log1p(jnp.exp(-jnp.abs(x)))

    # Focal modulation: alpha * (1 - exp(-bce))**gamma * bce
    pt = jnp.exp(-bce)
    one_minus_pt = jnp.maximum(1.0 - pt, 0.0)  # guard against pt ~ 1 + eps

    g = float(gamma)
    if g == 2.0:                      # module default: avoid float pow (EUP)
        mod = one_minus_pt * one_minus_pt
    elif g == 1.0:
        mod = one_minus_pt
    elif g.is_integer():
        mod = lax.integer_pow(one_minus_pt, int(g))
    else:
        mod = one_minus_pt ** g
    loss = alpha * mod * bce

    if needs_mask:
        # Mask padded / out-of-bounds elements of the (partial) last block.
        i = pl.program_id(0)
        row_ids = lax.broadcasted_iota(jnp.int32, loss.shape, 0)
        lane_ids = lax.broadcasted_iota(jnp.int32, loss.shape, 1)
        gidx = (i * row_block + row_ids) * LANES + lane_ids
        loss = jnp.where(gidx < n, loss, 0.0)

    # Reduce (row_block, 128) -> (8, 128) partial (mostly vreg adds); the tiny
    # cross-lane finish happens outside the kernel so the grid stays parallel.
    partial = jnp.sum(loss.reshape(row_block // SUBLANES, SUBLANES, LANES),
                      axis=0)
    out_ref[...] = partial.reshape(1, SUBLANES, LANES)


def focal_loss(inputs, targets, alpha=1.0, gamma=2.0):
    """Pallas TPU implementation of FocalLoss.forward (returns scalar mean)."""
    assert inputs.shape == targets.shape
    n = int(inputs.size)

    # Keep original dtypes in HBM; cast to f32 inside the kernel.
    x = inputs.reshape(-1)
    t = targets.reshape(-1)

    # Pad only if needed so the flat length fills whole (8, 128) tiles.
    tile = SUBLANES * LANES
    n_pad = ((n + tile - 1) // tile) * tile
    if n_pad != n:
        x = jnp.pad(x, (0, n_pad - n))
        t = jnp.pad(t, (0, n_pad - n))

    rows = n_pad // LANES            # multiple of 8
    x2 = x.reshape(rows, LANES)
    t2 = t.reshape(rows, LANES)

    row_block = min(MAX_ROW_BLOCK, rows)           # multiple of 8 or full dim
    num_blocks = (rows + row_block - 1) // row_block
    needs_mask = (num_blocks * row_block * LANES) != n

    kernel = functools.partial(
        _focal_loss_kernel,
        alpha=float(alpha), gamma=float(gamma),
        n=n, row_block=row_block, needs_mask=needs_mask)

    in_spec = pl.BlockSpec((row_block, LANES), lambda i: (i, 0))

    partials = pl.pallas_call(
        kernel,
        out_shape=jax.ShapeDtypeStruct((num_blocks, SUBLANES, LANES),
                                       jnp.float32),
        grid_spec=pltpu.PrefetchScalarGridSpec(
            num_scalar_prefetch=0,
            grid=(num_blocks,),
            in_specs=[in_spec, in_spec],
            out_specs=pl.BlockSpec((1, SUBLANES, LANES), lambda i: (i, 0, 0)),
        ),
        compiler_params=pltpu.CompilerParams(
            dimension_semantics=("parallel",),   # independent per-block output
        ),
    )(x2, t2)

    return jnp.sum(partials) / jnp.float32(n)


def _reference_focal_loss(inputs, targets, alpha=1.0, gamma=2.0):
    x = inputs.astype(jnp.float32)
    t = targets.astype(jnp.float32)
    bce = jnp.maximum(x, 0.0) - x * t + jnp.log1p(jnp.exp(-jnp.abs(x)))
    pt = jnp.exp(-bce)
    return jnp.mean(alpha * (1.0 - pt) ** gamma * bce)


if __name__ == "__main__":
    key = jax.random.PRNGKey(0)
    k1, k2 = jax.random.split(key)

    # Small NCHW-shaped logits + binary targets, as the module's usage implies.
    shape = (2, 4, 16, 16)
    inputs = jax.random.normal(k1, shape, dtype=jnp.float32)
    targets = (jax.random.uniform(k2, shape) > 0.5).astype(jnp.float32)

    out = focal_loss(inputs, targets, alpha=1.0, gamma=2.0)
    out = jax.block_until_ready(out)

    ref = _reference_focal_loss(inputs, targets, alpha=1.0, gamma=2.0)
    assert jnp.allclose(out, ref, rtol=1e-5, atol=1e-6), (out, ref)

    print("KERNEL_OK")
</pallas_src>

<mosaic_0001>
module attributes {stable_mosaic.version = 11 : i64} {
  func.func @_focal_loss_kernel(%arg0: i32, %arg1: memref<16x128xf32, #tpu.memory_space<vmem>>, %arg2: memref<16x128xf32, #tpu.memory_space<vmem>>, %arg3: memref<1x8x128xf32, #tpu.memory_space<vmem>>) attributes {dimension_semantics = [#tpu.dimension_semantics<parallel>], iteration_bounds = array<i64: 1>, scalar_prefetch = 0 : i64, scratch_operands = 0 : i64, tpu.core_type = #tpu.core_type<tc>, window_params = [{transform_indices = @transform_0, window_bounds = array<i64: 16, 128>}, {transform_indices = @transform_1, window_bounds = array<i64: 16, 128>}, {transform_indices = @transform_2, window_bounds = array<i64: 1, 8, 128>}]} {
    %c0 = arith.constant 0 : index
    %c0_0 = arith.constant 0 : index
    %0 = vector.load %arg1[%c0, %c0_0] : memref<16x128xf32, #tpu.memory_space<vmem>>, vector<16x128xf32>
    %c0_1 = arith.constant 0 : index
    %c0_2 = arith.constant 0 : index
    %1 = vector.load %arg2[%c0_1, %c0_2] : memref<16x128xf32, #tpu.memory_space<vmem>>, vector<16x128xf32>
    %cst = arith.constant 0.000000e+00 : f32
    %2 = vector.broadcast %cst : f32 to vector<16x128xf32>
    %3 = arith.maximumf %0, %2 : vector<16x128xf32>
    %4 = arith.mulf %0, %1 : vector<16x128xf32>
    %5 = arith.subf %3, %4 : vector<16x128xf32>
    %6 = math.absf %0 : vector<16x128xf32>
    %cst_3 = arith.constant 0.000000e+00 : f32
    %7 = vector.broadcast %cst_3 : f32 to vector<16x128xf32>
    %8 = arith.subf %7, %6 : vector<16x128xf32>
    %9 = math.exp %8 : vector<16x128xf32>
    %10 = math.log1p %9 : vector<16x128xf32>
    %11 = arith.addf %5, %10 : vector<16x128xf32>
    %cst_4 = arith.constant 0.000000e+00 : f32
    %12 = vector.broadcast %cst_4 : f32 to vector<16x128xf32>
    %13 = arith.subf %12, %11 : vector<16x128xf32>
    %14 = math.exp %13 : vector<16x128xf32>
    %cst_5 = arith.constant 1.000000e+00 : f32
    %15 = vector.broadcast %cst_5 : f32 to vector<16x128xf32>
    %16 = arith.subf %15, %14 : vector<16x128xf32>
    %cst_6 = arith.constant 0.000000e+00 : f32
    %17 = vector.broadcast %cst_6 : f32 to vector<16x128xf32>
    %18 = arith.maximumf %16, %17 : vector<16x128xf32>
    %19 = arith.mulf %18, %18 : vector<16x128xf32>
    %cst_7 = arith.constant 1.000000e+00 : f32
    %20 = vector.broadcast %cst_7 : f32 to vector<16x128xf32>
    %21 = arith.mulf %20, %19 : vector<16x128xf32>
    %22 = arith.mulf %21, %11 : vector<16x128xf32>
    %23 = vector.shape_cast %22 : vector<16x128xf32> to vector<2x8x128xf32>
    %cst_8 = arith.constant dense<0.000000e+00> : vector<8x128xf32>
    %24 = vector.multi_reduction <add>, %23, %cst_8 [0] : vector<2x8x128xf32> to vector<8x128xf32>
    %25 = vector.shape_cast %24 : vector<8x128xf32> to vector<1x8x128xf32>
    %c0_9 = arith.constant 0 : index
    %c0_10 = arith.constant 0 : index
    %c0_11 = arith.constant 0 : index
    %26 = vector.load %arg3[%c0_9, %c0_10, %c0_11] : memref<1x8x128xf32, #tpu.memory_space<vmem>>, vector<1x8x128xf32>
    tpu.vector_store %arg3[%c0_9, %c0_10, %c0_11], %25 {strides = array<i32>} : memref<1x8x128xf32, #tpu.memory_space<vmem>>, vector<1x8x128xf32>,
    return
  }
  func.func @transform_0(%arg0: i32) -> (i32, i32) {
    %c0_i32 = arith.constant 0 : i32
    %c0_i32_0 = arith.constant 0 : i32
    return %arg0, %c0_i32 : i32, i32
  }
  func.func @transform_1(%arg0: i32) -> (i32, i32) {
    %c0_i32 = arith.constant 0 : i32
    %c0_i32_0 = arith.constant 0 : i32
    return %arg0, %c0_i32 : i32, i32
  }
  func.func @transform_2(%arg0: i32) -> (i32, i32, i32) {
    %c0_i32 = arith.constant 0 : i32
    %c0_i32_0 = arith.constant 0 : i32
    %c0_i32_1 = arith.constant 0 : i32
    return %arg0, %c0_i32, %c0_i32_0 : i32, i32, i32
  }
}

</mosaic_0001>

<llo_original>
// kernel: tpu_custom_call.1
$region0: #{tpu_custom_call.1}
  #allocation0 [shape = 'u32[]', space=smem, size = 0x4, offset = 0x4, fixed_abs, tag = 'smem constant byte address 0x4 - core index']
  #allocation1 [shape = 'u32[144,128]{1,0:T(1,128)}', space=vmem, size = 0x12000, scoped, tag = 'internal scratch']
  %s0 = inlined_call_operand.hbm [shape: f32[16,128], index: 0, kind: input, shape index: {}]
  %s1 = inlined_call_operand.hbm [shape: f32[16,128], index: 1, kind: input, shape index: {}]
  %s2 = inlined_call_operand.hbm [shape: f32[1,8,128], index: 2, kind: output, shape index: {}]
  %s3 = sld [smem:[#allocation0]]
  $region26: #{tpu_custom_call.1} parent=0
    _
  %s5 = ssub.s32 1, %s3
  %s6 = scalar_select 0, %s5, %s3
  $region1: #{tpu_custom_call.1} parent=0
    #allocation2 [shape = 'u8[8192]{0}', space=vmem, size = 0x2000, scoped, tag = 'input window, operand 0, single buffered']
    #allocation3 [shape = 's32[1]{0}', space=sflag, size = 0x4, scoped, tag = 'scoped memory for tpu_custom_call.1']
    #allocation4 [shape = 's32[1]{0}', space=sflag, size = 0x4, scoped, tag = 'scoped memory for tpu_custom_call.1']
    #allocation5 [shape = 'u8[8192]{0}', space=vmem, size = 0x2000, scoped, tag = 'input window, operand 1, single buffered']
    #allocation6 [shape = 's32[1]{0}', space=sflag, size = 0x4, scoped, tag = 'scoped memory for tpu_custom_call.1']
    #allocation7 [shape = 'u8[4096]{0}', space=vmem, size = 0x1000, scoped, tag = 'output window, operand 0, single buffered']
    %7 = vsyncpa [#allocation3], 0
    %8 = vsyncpa [#allocation6], 0
    %9 = vsyncpa [#allocation4], 0
    // Predicated region
    $region2: #{tpu_custom_call.1} parent=1 // pred_check
      _
    $region3: #{tpu_custom_call.1} parent=1 // pred_check_branch
      %11 = sbr.rel (0) target = $region5
    $region4: #{tpu_custom_call.1} parent=1 // pred_region
      %s13 = ssub.s32 256, 256
      %14 = vsyncadd [#allocation3], %s13
      %s15 = sshll.u32 [#allocation2], 4
      %s16 = int_to_ptr.vmem [resolvable:$true] %s15
      %21 = dma.hbm_to_vmem [thread:$0]  %s0, 256, %s16, [#allocation3], 128, 128, 8
    $region5: #{tpu_custom_call.1} parent=1 // pred_fallthru
      _
    // Predicated region
    $region6: #{tpu_custom_call.1} parent=1 // pred_check
      _
    $region7: #{tpu_custom_call.1} parent=1 // pred_check_branch
      %23 = sbr.rel (0) target = $region9
    $region8: #{tpu_custom_call.1} parent=1 // pred_region
      %s25 = ssub.s32 256, 256
      %26 = vsyncadd [#allocation6], %s25
      %s27 = sshll.u32 [#allocation5], 4
      %s28 = int_to_ptr.vmem [resolvable:$true] %s27
      %33 = dma.hbm_to_vmem [thread:$0]  %s1, 256, %s28, [#allocation6], 128, 128, 8
    $region9: #{tpu_custom_call.1} parent=1 // pred_fallthru
      _
    // Predicated region
    $region10: #{tpu_custom_call.1} parent=1 // pred_check
      _
    $region11: #{tpu_custom_call.1} parent=1 // pred_check_branch
      %35 = sbr.rel (0) target = $region13
    $region12: #{tpu_custom_call.1} parent=1 // pred_region
      %36 = dma.done [#allocation3], 256
    $region13: #{tpu_custom_call.1} parent=1 // pred_fallthru
      _
    // Predicated region
    $region14: #{tpu_custom_call.1} parent=1 // pred_check
      _
    $region15: #{tpu_custom_call.1} parent=1 // pred_check_branch
      %38 = sbr.rel (0) target = $region17
    $region16: #{tpu_custom_call.1} parent=1 // pred_region
      %39 = dma.done [#allocation6], 256
    $region17: #{tpu_custom_call.1} parent=1 // pred_fallthru
      _
    %v40 = vld [vmem:[#allocation2] sm:$0xff]
    %v41 = vld [vmem:[#allocation2 + $0x8] sm:$0xff]
    %v42 = vld [vmem:[#allocation5] sm:$0xff]
    %v43 = vld [vmem:[#allocation5 + $0x8] sm:$0xff]
    %v44 = vmax.f32 %v40, 0.0
    %v45 = vmax.f32 %v41, 0.0
    %v46 = vmul.f32 %v40, %v42
    %v47 = vmul.f32 %v41, %v43
    %v48 = vsub.f32 %v44, %v46
    %v49 = vsub.f32 %v45, %v47
    %v50 = vand.u32 2147483647, %v40
    %v51 = vand.u32 2147483647, %v41
    %v52 = vsub.f32 0.0, %v50
    %v53 = vsub.f32 0.0, %v51
    %v54 = vmul.f32 %v52, 1.442695
    %v55 = vpow.pop %v54
    %v56 = vmul.f32 %v53, 1.442695
    %v57 = vpow.pop %v56
    %v58 = vadd.f32 %v55, 1.0
    %v59 = vlog2.pop %v58
    %v60 = vmul.f32 %v59, 0.6931472
    %v61 = vmul.f32 -0.5, %v55
    %v62 = vadd.f32 %v61, 1.0
    %v63 = vmul.f32 %v62, %v55
    %v64 = vand.u32 2147483647, %v55
    %vm65 = vcmp.lt.f32.partialorder %v64, 0.0004427343
    %v66 = vsel %vm65, %v63, %v60
    %v67 = vadd.f32 %v57, 1.0
    %v68 = vlog2.pop %v67
    %v69 = vmul.f32 %v68, 0.6931472
    %v70 = vmul.f32 -0.5, %v57
    %v71 = vadd.f32 %v70, 1.0
    %v72 = vmul.f32 %v71, %v57
    %v73 = vand.u32 2147483647, %v57
    %vm74 = vcmp.lt.f32.partialorder %v73, 0.0004427343
    %v75 = vsel %vm74, %v72, %v69
    %v76 = vadd.f32 %v48, %v66
    %v77 = vadd.f32 %v49, %v75
    %v78 = vsub.f32 0.0, %v76
    %v79 = vsub.f32 0.0, %v77
    %v80 = vmul.f32 %v78, 1.442695
    %v81 = vpow.pop %v80
    %v82 = vmul.f32 %v79, 1.442695
    %v83 = vpow.pop %v82
    %v84 = vsub.f32 1.0, %v81
    %v85 = vsub.f32 1.0, %v83
    %v86 = vmax.f32 %v84, 0.0
    %v87 = vmax.f32 %v85, 0.0
    %v88 = vmul.f32 %v86, %v86
    %v89 = vmul.f32 %v87, %v87
    %v90 = vmul.f32 %v88, %v76
    %v91 = vmul.f32 %v89, %v77
    %v92 = vadd.f32 %v90, %v91
    %93 = vst [vmem:[#allocation7] sm:$0xff] %v92
    // Predicated region
    $region18: #{tpu_custom_call.1} parent=1 // pred_check
      _
    $region19: #{tpu_custom_call.1} parent=1 // pred_check_branch
      %95 = sbr.rel (0) target = $region21
    $region20: #{tpu_custom_call.1} parent=1 // pred_region
      %s97 = ssub.s32 128, 128
      %98 = vsyncadd [#allocation4], %s97
      %s100 = sshll.u32 [#allocation7], 4
      %s101 = int_to_ptr.vmem [resolvable:$true] %s100
      %103 = dma.vmem_to_hbm [thread:$0]  %s101, 128, %s2, [#allocation4]
    $region21: #{tpu_custom_call.1} parent=1 // pred_fallthru
      _
    // Predicated region
    $region22: #{tpu_custom_call.1} parent=1 // pred_check
      _
    $region23: #{tpu_custom_call.1} parent=1 // pred_check_branch
      %105 = sbr.rel (0) target = $region25
    $region24: #{tpu_custom_call.1} parent=1 // pred_region
      %106 = dma.done [#allocation4], 128
    $region25: #{tpu_custom_call.1} parent=1 // pred_fallthru
      _
    %107 = vsyncpa [#allocation3], 1
    %108 = vsyncpa [#allocation6], 1
    %109 = vsyncpa [#allocation4], 1

</llo_original>
